<compile_context>
chip_gen: v7x
topology: tpu7x:2x2x1
jax: 0.10.0
libtpu: 0.0.40
codegen_flags: <defaults>
</compile_context>

<pallas_src>
import functools

import jax
import jax.numpy as jnp
from jax import lax
from jax.experimental import pallas as pl
from jax.experimental.pallas import tpu as pltpu

LOG_STD_MIN = -2.0
LOG_STD_MAX = 2.0

_STRIPE = 128        # lane width of each parameter stripe (W1 | W2 | heads)
_MAX_ROW_TILE = 512  # batch rows per grid step for large rollouts


def _round_up(x, m):
    return (x + m - 1) // m * m


def _policy_kernel(x_ref, p_ref, out_ref, *, d_in, hidden, action_dim):
    """Whole network for one batch tile; all operands resident in VMEM.

    p_ref layout ([R_pad, 3*128] f32, lane-aligned stripes):
      stripe 0 (lanes   0:128): rows 0:d_in -> W1,    bias row -> b1
      stripe 1 (lanes 128:256): rows 0:H    -> W2,    bias row -> b2
      stripe 2 (lanes 256:384): rows 0:H    -> [Wm|Ws], bias row -> [bm|bs]
      bias row index = max(d_in, H)   (always past every weight's row range)
    """
    H = hidden
    A = action_dim
    br = max(d_in, H)

    x = x_ref[...]

    # ---- layer 1: one matmul (K = d_in) ----
    h = jnp.dot(x, p_ref[0:d_in, 0:H], preferred_element_type=jnp.float32)
    h = jnp.maximum(h + p_ref[br:br + 1, 0:H], 0.0)

    # ---- layer 2 ----
    h = jnp.dot(h, p_ref[0:H, _STRIPE:_STRIPE + H],
                preferred_element_type=jnp.float32)
    h = jnp.maximum(h + p_ref[br:br + 1, _STRIPE:_STRIPE + H], 0.0)

    # ---- fused heads: one matmul -> [tile_B, 2A] = [mean | log_std] ----
    head = jnp.dot(h, p_ref[0:H, 2 * _STRIPE:2 * _STRIPE + 2 * A],
                   preferred_element_type=jnp.float32)
    head = head + p_ref[br:br + 1, 2 * _STRIPE:2 * _STRIPE + 2 * A]

    # clamp only the log_std half (lanes >= A); single full-block store.
    lane = lax.broadcasted_iota(jnp.int32, head.shape, dimension=1)
    head = jnp.where(lane >= A,
                     jnp.clip(head, LOG_STD_MIN, LOG_STD_MAX),
                     head)
    out_ref[...] = head.astype(out_ref.dtype)


def pack_params(params, d_in, hidden, action_dim):
    """Pack all weights/biases into one lane-aligned slab (once, off hot path)."""
    H, A = hidden, action_dim
    assert H <= _STRIPE and 2 * A <= _STRIPE and d_in <= _STRIPE
    bias_row = max(d_in, H)
    R = _round_up(bias_row + 1, 8)
    P = jnp.zeros((R, 3 * _STRIPE), jnp.float32)
    # stripe 0: W1 / b1
    P = P.at[0:d_in, 0:H].set(params["w1"])
    P = P.at[bias_row, 0:H].set(params["b1"].reshape(-1))
    # stripe 1: W2 / b2
    P = P.at[0:H, _STRIPE:_STRIPE + H].set(params["w2"])
    P = P.at[bias_row, _STRIPE:_STRIPE + H].set(params["b2"].reshape(-1))
    # stripe 2: [Wm | Ws] / [bm | bs]
    P = P.at[0:H, 2 * _STRIPE:2 * _STRIPE + A].set(params["wm"])
    P = P.at[0:H, 2 * _STRIPE + A:2 * _STRIPE + 2 * A].set(params["ws"])
    P = P.at[bias_row, 2 * _STRIPE:2 * _STRIPE + A].set(params["bm"].reshape(-1))
    P = P.at[bias_row, 2 * _STRIPE + A:2 * _STRIPE + 2 * A].set(
        params["bs"].reshape(-1))
    return P


def make_policy_forward(d_ap, d_cy, d_pk, hidden, action_dim,
                        max_row_tile=_MAX_ROW_TILE):
    d_in = d_ap + d_cy + d_pk
    r_pad = _round_up(max(d_in, hidden) + 1, 8)
    kernel = functools.partial(_policy_kernel, d_in=d_in, hidden=hidden,
                               action_dim=action_dim)

    @jax.jit
    def forward(observations, packed_params):
        ap = observations["agent_position"]
        B = ap.shape[0]
        # Single lane-contiguous obs tensor (one XLA concat, off the kernel).
        x = jnp.concatenate(
            [ap.reshape(B, -1),
             observations["cyan"].reshape(B, -1),
             observations["pink"].reshape(B, -1)], axis=1).astype(jnp.float32)

        # Batch grid: row tile multiple of 8, up to max_row_tile rows/step.
        tile = min(max_row_tile, _round_up(B, 8))
        b_pad = _round_up(B, tile)
        if b_pad != B:
            x = jnp.pad(x, ((0, b_pad - B), (0, 0)))

        head = pl.pallas_call(
            kernel,
            out_shape=jax.ShapeDtypeStruct((b_pad, 2 * action_dim), jnp.float32),
            grid=(b_pad // tile,),
            in_specs=[
                pl.BlockSpec((tile, d_in), lambda i: (i, 0)),
                # constant index_map -> param slab DMA'd once, VMEM-resident
                pl.BlockSpec((r_pad, 3 * _STRIPE), lambda i: (0, 0)),
            ],
            out_specs=pl.BlockSpec((tile, 2 * action_dim), lambda i: (i, 0)),
            compiler_params=pltpu.CompilerParams(
                dimension_semantics=("parallel",)),
        )(x, packed_params)

        head = head[:B]
        mean = head[:, :action_dim]
        log_std = head[:, action_dim:]
        return mean, log_std

    return forward


def init_params(key, input_size, hidden, action_dim):
    """Deterministic PyTorch-like uniform fan-in init (weights as [in, out])."""
    def linear(k, fan_in, fan_out):
        k1, k2 = jax.random.split(k)
        bound = 1.0 / jnp.sqrt(fan_in)
        w = jax.random.uniform(k1, (fan_in, fan_out), jnp.float32, -bound, bound)
        b = jax.random.uniform(k2, (1, fan_out), jnp.float32, -bound, bound)
        return w, b

    k1, k2, k3, k4 = jax.random.split(key, 4)
    w1, b1 = linear(k1, input_size, hidden)
    w2, b2 = linear(k2, hidden, hidden)
    wm, bm = linear(k3, hidden, action_dim)
    ws, bs = linear(k4, hidden, action_dim)
    return {"w1": w1, "b1": b1, "w2": w2, "b2": b2,
            "wm": wm, "bm": bm, "ws": ws, "bs": bs}


def reference_forward(observations, params):
    """Plain-JAX reference matching the PyTorch module exactly."""
    ap = observations["agent_position"]
    B = ap.shape[0]
    inputs = jnp.concatenate([ap.reshape(B, -1),
                              observations["cyan"].reshape(B, -1),
                              observations["pink"].reshape(B, -1)], axis=1)
    h = jnp.maximum(inputs @ params["w1"] + params["b1"], 0.0)
    h = jnp.maximum(h @ params["w2"] + params["b2"], 0.0)
    mean = h @ params["wm"] + params["bm"]
    log_std = jnp.clip(h @ params["ws"] + params["bs"], LOG_STD_MIN, LOG_STD_MAX)
    return mean, log_std


if __name__ == "__main__":
    key = jax.random.PRNGKey(0)

    # Small shapes consistent with the module.
    batch = 2
    agent_position_size = 2          # observation_space['agent_position'].shape[0]
    num_cyan, cyan_feat = 3, 4       # num_cyan * feature_space.shape[0]
    num_pink, pink_feat = 2, 4
    action_dim = 3                   # action_space.shape[0]
    mlp_hidden = 32

    d_ap = agent_position_size
    d_cy = num_cyan * cyan_feat
    d_pk = num_pink * pink_feat
    input_size = d_ap + d_cy + d_pk

    k_obs, k_cyan, k_pink, k_params = jax.random.split(key, 4)
    observations = {
        "agent_position": jax.random.normal(
            k_obs, (batch, agent_position_size), jnp.float32),
        "cyan": jax.random.normal(k_cyan, (batch, num_cyan, cyan_feat), jnp.float32),
        "pink": jax.random.normal(k_pink, (batch, num_pink, pink_feat), jnp.float32),
    }

    params = init_params(k_params, input_size, mlp_hidden, action_dim)
    packed = pack_params(params, input_size, mlp_hidden, action_dim)

    forward = make_policy_forward(d_ap, d_cy, d_pk, mlp_hidden, action_dim)
    mean, log_std = forward(observations, packed)
    jax.block_until_ready((mean, log_std))

    # Correctness check against the plain-JAX reference.
    mean_ref, log_std_ref = reference_forward(observations, params)
    assert mean.shape == (batch, action_dim) and log_std.shape == (batch, action_dim)
    assert jnp.allclose(mean, mean_ref, atol=1e-4), "mean mismatch"
    assert jnp.allclose(log_std, log_std_ref, atol=1e-4), "log_std mismatch"

    # Exercise the batched-rollout path (grid > 1 step) as well.
    big_B = 1000
    kb1, kb2, kb3 = jax.random.split(jax.random.PRNGKey(1), 3)
    big_obs = {
        "agent_position": jax.random.normal(kb1, (big_B, agent_position_size), jnp.float32),
        "cyan": jax.random.normal(kb2, (big_B, num_cyan, cyan_feat), jnp.float32),
        "pink": jax.random.normal(kb3, (big_B, num_pink, pink_feat), jnp.float32),
    }
    m_big, s_big = forward(big_obs, packed)
    jax.block_until_ready((m_big, s_big))
    m_big_ref, s_big_ref = reference_forward(big_obs, params)
    assert jnp.allclose(m_big, m_big_ref, atol=1e-4), "batched mean mismatch"
    assert jnp.allclose(s_big, s_big_ref, atol=1e-4), "batched log_std mismatch"

    print("KERNEL_OK")
</pallas_src>

<mosaic_0001>
module attributes {stable_mosaic.version = 11 : i64} {
  func.func @_policy_kernel(%arg0: i32, %arg1: memref<8x22xf32, #tpu.memory_space<vmem>>, %arg2: memref<40x384xf32, #tpu.memory_space<vmem>>, %arg3: memref<8x6xf32, #tpu.memory_space<vmem>>) attributes {dimension_semantics = [#tpu.dimension_semantics<parallel>], iteration_bounds = array<i64: 1>, scalar_prefetch = 0 : i64, scratch_operands = 0 : i64, tpu.core_type = #tpu.core_type<tc>, window_params = [{transform_indices = @transform_0, window_bounds = array<i64: 8, 22>}, {pipeline_mode = #tpu.pipeline_mode<synchronous>, transform_indices = @transform_1, window_bounds = array<i64: 40, 384>}, {transform_indices = @transform_2, window_bounds = array<i64: 8, 6>}]} {
    %c0 = arith.constant 0 : index
    %c0_0 = arith.constant 0 : index
    %0 = vector.load %arg1[%c0, %c0_0] : memref<8x22xf32, #tpu.memory_space<vmem>>, vector<8x22xf32>
    %c0_1 = arith.constant 0 : index
    %c0_2 = arith.constant 0 : index
    %1 = vector.load %arg2[%c0_1, %c0_2] : memref<40x384xf32, #tpu.memory_space<vmem>>, vector<22x32xf32>
    %cst = arith.constant dense<0.000000e+00> : vector<8x32xf32>
    %2 = tpu.matmul %0, %1, %cst {dimension_numbers = #tpu.dot_dimension_numbers<[1], [0], [0], [1], [0, 0, 1, 1], [], []>} : vector<8x22xf32>, vector<22x32xf32>, vector<8x32xf32> -> vector<8x32xf32>
    %c32 = arith.constant 32 : index
    %c0_3 = arith.constant 0 : index
    %3 = vector.load %arg2[%c32, %c0_3] : memref<40x384xf32, #tpu.memory_space<vmem>>, vector<1x32xf32>
    %4 = vector.broadcast %3 : vector<1x32xf32> to vector<8x32xf32>
    %5 = arith.addf %2, %4 : vector<8x32xf32>
    %cst_4 = arith.constant 0.000000e+00 : f32
    %6 = vector.broadcast %cst_4 : f32 to vector<8x32xf32>
    %7 = arith.maximumf %5, %6 : vector<8x32xf32>
    %c0_5 = arith.constant 0 : index
    %c128 = arith.constant 128 : index
    %8 = vector.load %arg2[%c0_5, %c128] : memref<40x384xf32, #tpu.memory_space<vmem>>, vector<32x32xf32>
    %cst_6 = arith.constant dense<0.000000e+00> : vector<8x32xf32>
    %9 = tpu.matmul %7, %8, %cst_6 {dimension_numbers = #tpu.dot_dimension_numbers<[1], [0], [0], [1], [0, 0, 1, 1], [], []>} : vector<8x32xf32>, vector<32x32xf32>, vector<8x32xf32> -> vector<8x32xf32>
    %c32_7 = arith.constant 32 : index
    %c128_8 = arith.constant 128 : index
    %10 = vector.load %arg2[%c32_7, %c128_8] : memref<40x384xf32, #tpu.memory_space<vmem>>, vector<1x32xf32>
    %11 = vector.broadcast %10 : vector<1x32xf32> to vector<8x32xf32>
    %12 = arith.addf %9, %11 : vector<8x32xf32>
    %cst_9 = arith.constant 0.000000e+00 : f32
    %13 = vector.broadcast %cst_9 : f32 to vector<8x32xf32>
    %14 = arith.maximumf %12, %13 : vector<8x32xf32>
    %c0_10 = arith.constant 0 : index
    %c256 = arith.constant 256 : index
    %15 = vector.load %arg2[%c0_10, %c256] : memref<40x384xf32, #tpu.memory_space<vmem>>, vector<32x6xf32>
    %cst_11 = arith.constant dense<0.000000e+00> : vector<8x6xf32>
    %16 = tpu.matmul %14, %15, %cst_11 {dimension_numbers = #tpu.dot_dimension_numbers<[1], [0], [0], [1], [0, 0, 1, 1], [], []>} : vector<8x32xf32>, vector<32x6xf32>, vector<8x6xf32> -> vector<8x6xf32>
    %c32_12 = arith.constant 32 : index
    %c256_13 = arith.constant 256 : index
    %17 = vector.load %arg2[%c32_12, %c256_13] : memref<40x384xf32, #tpu.memory_space<vmem>>, vector<1x6xf32>
    %18 = vector.broadcast %17 : vector<1x6xf32> to vector<8x6xf32>
    %19 = arith.addf %16, %18 : vector<8x6xf32>
    %20 = tpu.iota {dimensions = array<i32: 1>} : vector<8x6xi32>
    %c3_i32 = arith.constant 3 : i32
    %21 = vector.broadcast %c3_i32 : i32 to vector<8x6xi32>
    %22 = arith.cmpi sge, %20, %21 : vector<8x6xi32>
    %cst_14 = arith.constant -2.000000e+00 : f32
    %cst_15 = arith.constant 2.000000e+00 : f32
    %23 = vector.broadcast %cst_14 : f32 to vector<8x6xf32>
    %24 = arith.maximumf %23, %19 : vector<8x6xf32>
    %25 = vector.broadcast %cst_15 : f32 to vector<8x6xf32>
    %26 = arith.minimumf %25, %24 : vector<8x6xf32>
    %27 = arith.select %22, %26, %19 : vector<8x6xi1>, vector<8x6xf32>
    %c0_16 = arith.constant 0 : index
    %c0_17 = arith.constant 0 : index
    %28 = vector.load %arg3[%c0_16, %c0_17] : memref<8x6xf32, #tpu.memory_space<vmem>>, vector<8x6xf32>
    tpu.vector_store %arg3[%c0_16, %c0_17], %27 {strides = array<i32>} : memref<8x6xf32, #tpu.memory_space<vmem>>, vector<8x6xf32>,
    return
  }
  func.func @transform_0(%arg0: i32) -> (i32, i32) {
    %c0_i32 = arith.constant 0 : i32
    %c0_i32_0 = arith.constant 0 : i32
    return %arg0, %c0_i32 : i32, i32
  }
  func.func @transform_1(%arg0: i32) -> (i32, i32) {
    %c0_i32 = arith.constant 0 : i32
    %c0_i32_0 = arith.constant 0 : i32
    %c0_i32_1 = arith.constant 0 : i32
    return %c0_i32, %c0_i32_0 : i32, i32
  }
  func.func @transform_2(%arg0: i32) -> (i32, i32) {
    %c0_i32 = arith.constant 0 : i32
    %c0_i32_0 = arith.constant 0 : i32
    return %arg0, %c0_i32 : i32, i32
  }
}

</mosaic_0001>

<llo_original>
// kernel: forward.1
$region0: #{forward.1}
  #allocation0 [shape = 'u32[]', space=smem, size = 0x4, offset = 0x4, fixed_abs, tag = 'smem constant byte address 0x4 - core index']
  #allocation1 [shape = 'u32[144,128]{1,0:T(1,128)}', space=vmem, size = 0x12000, scoped, tag = 'internal scratch']
  %s0 = inlined_call_operand.vmem [shape: f32[8,22], index: 0, kind: input, shape index: {}]
  %s1 = inlined_call_operand.hbm [shape: f32[40,384], index: 1, kind: input, shape index: {}]
  %s2 = inlined_call_operand.vmem [shape: f32[8,6], index: 2, kind: output, shape index: {}]
  %s3 = sld [smem:[#allocation0]]
  $region22: #{forward.1} parent=0
    _
  %s5 = ssub.s32 1, %s3
  %s6 = scalar_select 0, %s5, %s3
  $region1: #{forward.1} parent=0
    #allocation2 [shape = 'u8[61440]{0}', space=vmem, size = 0xf000, scoped, tag = 'input window, operand 1, single buffered']
    #allocation3 [shape = 's32[1]{0}', space=sflag, size = 0x4, scoped, tag = 'scoped memory for forward.1']
    %7 = vsyncpa [#allocation3], 0
    // Predicated region
    $region2: #{forward.1} parent=1 // pred_check
      _
    $region3: #{forward.1} parent=1 // pred_check_branch
      %9 = sbr.rel (0) target = $region5
    $region4: #{forward.1} parent=1 // pred_region
      _
    $region5: #{forward.1} parent=1 // pred_fallthru
      _
    // Predicated region
    $region6: #{forward.1} parent=1 // pred_check
      _
    $region7: #{forward.1} parent=1 // pred_check_branch
      %11 = sbr.rel (0) target = $region9
    $region8: #{forward.1} parent=1 // pred_region
      %s13 = ssub.s32 1920, 1920
      %14 = vsyncadd [#allocation3], %s13
      %s15 = sshll.u32 [#allocation2], 4
      %s16 = int_to_ptr.vmem [resolvable:$true] %s15
      %21 = dma.hbm_to_vmem [thread:$0]  %s1, 1920, %s16, [#allocation3], 384, 384, 24
    $region9: #{forward.1} parent=1 // pred_fallthru
      _
    // Predicated region
    $region10: #{forward.1} parent=1 // pred_check
      _
    $region11: #{forward.1} parent=1 // pred_check_branch
      %23 = sbr.rel (0) target = $region13
    $region12: #{forward.1} parent=1 // pred_region
      %24 = dma.done [#allocation3], 1920
    $region13: #{forward.1} parent=1 // pred_fallthru
      _
    %v25 = vld [vmem:[%s0] sm:$0xff]
    %v26 = vld [vmem:[#allocation2] sm:$0xff]
    %v27 = vld [vmem:[#allocation2 + $0x18] sm:$0xff]
    %v28 = vld [vmem:[#allocation2 + $0x30] sm:$0x3f]
    %v29 = vld [vmem:[#allocation2 + $0x60] ss:$0 sm:$0xff]
    %vm30 = vcmask 179200
    %v32 = vsel %vm30, %v25, 0
    %vm34 = vcmask 1045504
    %v36 = vsel %vm34, %v28, 0
    %38 = vmatprep.subr.mxu0 0.0
    %39 = vmatpush1.msra.mxu0 %v26
    %40 = vmatprep.subr.mxu0 0.0
    %41 = vmatpush1.msra.mxu0 %v27
    %42 = vmatprep.subr.mxu0 0.0
    %43 = vmatpush1.msra.mxu0 %v36
    %44 = vmatprep.subr.mxu0 0.0
    %45 = vmatpush1.msra.mxu0 0.0
    %46 = vmatprep.subr.mxu0 0.0
    %47 = vmatpush1.msra.mxu0 0.0
    %48 = vmatprep.subr.mxu0 0.0
    %49 = vmatpush1.msra.mxu0 0.0
    %50 = vmatprep.subr.mxu0 0.0
    %51 = vmatpush1.msra.mxu0 0.0
    %52 = vmatprep.subr.mxu0 0.0
    %53 = vmatpush1.msra.mxu0 0.0
    %54 = vmatprep.subr.mxu0 0.0
    %55 = vmatpush1.msra.mxu0 0.0
    %56 = vmatprep.subr.mxu0 0.0
    %57 = vmatpush1.msra.mxu0 0.0
    %58 = vmatprep.subr.mxu0 0.0
    %59 = vmatpush1.msra.mxu0 0.0
    %60 = vmatprep.subr.mxu0 0.0
    %61 = vmatpush1.msra.mxu0 0.0
    %62 = vmatprep.subr.mxu0 0.0
    %63 = vmatpush1.msra.mxu0 0.0
    %64 = vmatprep.subr.mxu0 0.0
    %65 = vmatpush1.msra.mxu0 0.0
    %66 = vmatprep.subr.mxu0 0.0
    %67 = vmatpush1.msra.mxu0 0.0
    %68 = vmatprep.subr.mxu0 0.0
    %69 = vmatpush1.msra.mxu0 0.0
    %70 = vmatprep.subr.mxu0 0.0
    %71 = vmatpush1.msra.mxu0 0.0
    %72 = vmatprep.subr.mxu0 0.0
    %73 = vmatpush1.msra.mxu0 0.0
    %74 = vmatprep.subr.mxu0 0.0
    %75 = vmatpush1.msra.mxu0 0.0
    %76 = vmatprep.subr.mxu0 0.0
    %77 = vmatpush1.msra.mxu0 0.0
    %78 = vmatprep.subr.mxu0 0.0
    %79 = vmatpush1.msra.mxu0 0.0
    %80 = vmatprep.subr.mxu0 0.0
    %81 = vmatpush1.msra.mxu0 0.0
    %82 = vmatprep.subr.mxu0 0.0
    %83 = vmatpush1.msra.mxu0 0.0
    %84 = vmatprep.subr.mxu0 0.0
    %85 = vmatpush1.msra.mxu0 0.0
    %86 = vmatprep.subr.mxu0 0.0
    %87 = vmatpush1.msra.mxu0 0.0
    %88 = vmatprep.subr.mxu0 0.0
    %89 = vmatpush1.msra.mxu0 0.0
    %90 = vmatprep.subr.mxu0 0.0
    %91 = vmatpush1.msra.mxu0 0.0
    %92 = vmatprep.subr.mxu0 0.0
    %93 = vmatpush1.msra.mxu0 0.0
    %94 = vmatprep.subr.mxu0 0.0
    %95 = vmatpush1.msra.mxu0 0.0
    %96 = vmatprep.subr.mxu0 0.0
    %97 = vmatpush1.msra.mxu0 0.0
    %98 = vmatprep.subr.mxu0 0.0
    %99 = vmatpush1.msra.mxu0 0.0
    %100 = vmatprep.subr.mxu0 0.0
    %101 = vmatpush1.msra.mxu0 0.0
    %102 = vmatprep.mubr.f32.mxu0 0.0
    %103 = vmatmul.mubr.f32.gmra.mrb[0].mxu0 %v32
    %v104 = vpop.f32.mrb[0].mxu0
    %v105 = vadd.f32 %v29, %v104
    %v106 = vpop.f32.mrb[0].mxu0
    %107 = vdwg.mxu0
    %v108 = vmax.f32 %v105, 0.0
    %v109 = vld [vmem:[#allocation2 + $0x8] sm:$0xff]
    %v110 = vld [vmem:[#allocation2 + $0x20] sm:$0xff]
    %v111 = vld [vmem:[#allocation2 + $0x38] sm:$0xff]
    %v112 = vld [vmem:[#allocation2 + $0x50] sm:$0xff]
    %v113 = vld [vmem:[#allocation2 + $0x68] ss:$0 sm:$0xff]
    %vm114 = vcmask 261120
    %v116 = vsel %vm114, %v108, 0
    %118 = vmatprep.subr.mxu0 0.0
    %119 = vmatpush1.msra.mxu0 %v109
    %120 = vmatprep.subr.mxu0 0.0
    %121 = vmatpush1.msra.mxu0 %v110
    %122 = vmatprep.subr.mxu0 0.0
    %123 = vmatpush1.msra.mxu0 %v111
    %124 = vmatprep.subr.mxu0 0.0
    %125 = vmatpush1.msra.mxu0 %v112
    %126 = vmatprep.subr.mxu0 0.0
    %127 = vmatpush1.msra.mxu0 0.0
    %128 = vmatprep.subr.mxu0 0.0
    %129 = vmatpush1.msra.mxu0 0.0
    %130 = vmatprep.subr.mxu0 0.0
    %131 = vmatpush1.msra.mxu0 0.0
    %132 = vmatprep.subr.mxu0 0.0
    %133 = vmatpush1.msra.mxu0 0.0
    %134 = vmatprep.subr.mxu0 0.0
    %135 = vmatpush1.msra.mxu0 0.0
    %136 = vmatprep.subr.mxu0 0.0
    %137 = vmatpush1.msra.mxu0 0.0
    %138 = vmatprep.subr.mxu0 0.0
    %139 = vmatpush1.msra.mxu0 0.0
    %140 = vmatprep.subr.mxu0 0.0
    %141 = vmatpush1.msra.mxu0 0.0
    %142 = vmatprep.subr.mxu0 0.0
    %143 = vmatpush1.msra.mxu0 0.0
    %144 = vmatprep.subr.mxu0 0.0
    %145 = vmatpush1.msra.mxu0 0.0
    %146 = vmatprep.subr.mxu0 0.0
    %147 = vmatpush1.msra.mxu0 0.0
    %148 = vmatprep.subr.mxu0 0.0
    %149 = vmatpush1.msra.mxu0 0.0
    %150 = vmatprep.subr.mxu0 0.0
    %151 = vmatpush1.msra.mxu0 0.0
    %152 = vmatprep.subr.mxu0 0.0
    %153 = vmatpush1.msra.mxu0 0.0
    %154 = vmatprep.subr.mxu0 0.0
    %155 = vmatpush1.msra.mxu0 0.0
    %156 = vmatprep.subr.mxu0 0.0
    %157 = vmatpush1.msra.mxu0 0.0
    %158 = vmatprep.subr.mxu0 0.0
    %159 = vmatpush1.msra.mxu0 0.0
    %160 = vmatprep.subr.mxu0 0.0
    %161 = vmatpush1.msra.mxu0 0.0
    %162 = vmatprep.subr.mxu0 0.0
    %163 = vmatpush1.msra.mxu0 0.0
    %164 = vmatprep.subr.mxu0 0.0
    %165 = vmatpush1.msra.mxu0 0.0
    %166 = vmatprep.subr.mxu0 0.0
    %167 = vmatpush1.msra.mxu0 0.0
    %168 = vmatprep.subr.mxu0 0.0
    %169 = vmatpush1.msra.mxu0 0.0
    %170 = vmatprep.subr.mxu0 0.0
    %171 = vmatpush1.msra.mxu0 0.0
    %172 = vmatprep.subr.mxu0 0.0
    %173 = vmatpush1.msra.mxu0 0.0
    %174 = vmatprep.subr.mxu0 0.0
    %175 = vmatpush1.msra.mxu0 0.0
    %176 = vmatprep.subr.mxu0 0.0
    %177 = vmatpush1.msra.mxu0 0.0
    %178 = vmatprep.subr.mxu0 0.0
    %179 = vmatpush1.msra.mxu0 0.0
    %180 = vmatprep.subr.mxu0 0.0
    %181 = vmatpush1.msra.mxu0 0.0
    %182 = vmatprep.mubr.f32.mxu0 0.0
    %183 = vmatmul.mubr.f32.gmra.mrb[0].mxu0 %v116
    %v184 = vpop.f32.mrb[0].mxu0
    %v185 = vadd.f32 %v113, %v184
    %v186 = vpop.f32.mrb[0].mxu0
    %187 = vdwg.mxu0
    %v188 = vmax.f32 %v185, 0.0
    %v189 = vld [vmem:[#allocation2 + $0x10] sm:$0xff]
    %v190 = vld [vmem:[#allocation2 + $0x28] sm:$0xff]
    %v191 = vld [vmem:[#allocation2 + $0x40] sm:$0xff]
    %v192 = vld [vmem:[#allocation2 + $0x58] sm:$0xff]
    %v193 = vld [vmem:[#allocation2 + $0x70] ss:$0 sm:$0xff]
    %v195 = vsel %vm114, %v188, 0
    %197 = vmatprep.subr.mxu0 0.0
    %198 = vmatpush1.msra.mxu0 %v189
    %199 = vmatprep.subr.mxu0 0.0
    %200 = vmatpush1.msra.mxu0 %v190
    %201 = vmatprep.subr.mxu0 0.0
    %202 = vmatpush1.msra.mxu0 %v191
    %203 = vmatprep.subr.mxu0 0.0
    %204 = vmatpush1.msra.mxu0 %v192
    %205 = vmatprep.subr.mxu0 0.0
    %206 = vmatpush1.msra.mxu0 0.0
    %207 = vmatprep.subr.mxu0 0.0
    %208 = vmatpush1.msra.mxu0 0.0
    %209 = vmatprep.subr.mxu0 0.0
    %210 = vmatpush1.msra.mxu0 0.0
    %211 = vmatprep.subr.mxu0 0.0
    %212 = vmatpush1.msra.mxu0 0.0
    %213 = vmatprep.subr.mxu0 0.0
    %214 = vmatpush1.msra.mxu0 0.0
    %215 = vmatprep.subr.mxu0 0.0
    %216 = vmatpush1.msra.mxu0 0.0
    %217 = vmatprep.subr.mxu0 0.0
    %218 = vmatpush1.msra.mxu0 0.0
    %219 = vmatprep.subr.mxu0 0.0
    %220 = vmatpush1.msra.mxu0 0.0
    %221 = vmatprep.subr.mxu0 0.0
    %222 = vmatpush1.msra.mxu0 0.0
    %223 = vmatprep.subr.mxu0 0.0
    %224 = vmatpush1.msra.mxu0 0.0
    %225 = vmatprep.subr.mxu0 0.0
    %226 = vmatpush1.msra.mxu0 0.0
    %227 = vmatprep.subr.mxu0 0.0
    %228 = vmatpush1.msra.mxu0 0.0
    %229 = vmatprep.subr.mxu0 0.0
    %230 = vmatpush1.msra.mxu0 0.0
    %231 = vmatprep.subr.mxu0 0.0
    %232 = vmatpush1.msra.mxu0 0.0
    %233 = vmatprep.subr.mxu0 0.0
    %234 = vmatpush1.msra.mxu0 0.0
    %235 = vmatprep.subr.mxu0 0.0
    %236 = vmatpush1.msra.mxu0 0.0
    %237 = vmatprep.subr.mxu0 0.0
    %238 = vmatpush1.msra.mxu0 0.0
    %239 = vmatprep.subr.mxu0 0.0
    %240 = vmatpush1.msra.mxu0 0.0
    %241 = vmatprep.subr.mxu0 0.0
    %242 = vmatpush1.msra.mxu0 0.0
    %243 = vmatprep.subr.mxu0 0.0
    %244 = vmatpush1.msra.mxu0 0.0
    %245 = vmatprep.subr.mxu0 0.0
    %246 = vmatpush1.msra.mxu0 0.0
    %247 = vmatprep.subr.mxu0 0.0
    %248 = vmatpush1.msra.mxu0 0.0
    %249 = vmatprep.subr.mxu0 0.0
    %250 = vmatpush1.msra.mxu0 0.0
    %251 = vmatprep.subr.mxu0 0.0
    %252 = vmatpush1.msra.mxu0 0.0
    %253 = vmatprep.subr.mxu0 0.0
    %254 = vmatpush1.msra.mxu0 0.0
    %255 = vmatprep.subr.mxu0 0.0
    %256 = vmatpush1.msra.mxu0 0.0
    %257 = vmatprep.subr.mxu0 0.0
    %258 = vmatpush1.msra.mxu0 0.0
    %259 = vmatprep.subr.mxu0 0.0
    %260 = vmatpush1.msra.mxu0 0.0
    %261 = vmatprep.mubr.f32.mxu0 0.0
    %262 = vmatmul.mubr.f32.gmra.mrb[0].mxu0 %v195
    %v263 = vpop.f32.mrb[0].mxu0
    %v264 = vadd.f32 %v193, %v263
    %v265 = vpop.f32.mrb[0].mxu0
    %266 = vdwg.mxu0
    %v267 = vlaneseq
    %v268 = vand.u32 %v267, 127
    %vm269 = vcmp.ge.s32.totalorder %v268, 3
    %v270 = vmax.f32 %v264, -2.0
    %v271 = vmin.f32 %v270, 2.0
    %v272 = vsel %vm269, %v271, %v264
    %vm273 = vcmask 48128
    %274 = vst.msk [vmem:[%s2] sm:$0xff] %vm273, %v272
    // Predicated region
    $region14: #{forward.1} parent=1 // pred_check
      _
    $region15: #{forward.1} parent=1 // pred_check_branch
      %276 = sbr.rel (0) target = $region17
    $region16: #{forward.1} parent=1 // pred_region
      _
    $region17: #{forward.1} parent=1 // pred_fallthru
      _
    // Predicated region
    $region18: #{forward.1} parent=1 // pred_check
      _
    $region19: #{forward.1} parent=1 // pred_check_branch
      %278 = sbr.rel (0) target = $region21
    $region20: #{forward.1} parent=1 // pred_region
      _
    $region21: #{forward.1} parent=1 // pred_fallthru
      _
    %279 = vsyncpa [#allocation3], 1

</llo_original>
